<compile_context>
chip_gen: v6e
topology: v6e:2x2x1
jax: 0.10.0
libtpu: 0.0.40
codegen_flags: <defaults>
</compile_context>

<pallas_src>
import math
from functools import partial

import numpy as np
import jax
import jax.numpy as jnp
from jax.experimental import pallas as pl
from jax.experimental.pallas import tpu as pltpu


_MASK_VALUE = -1e30                 # large finite negative: no -inf - -inf NaNs
_VMEM_LIMIT = 48 * 1024 * 1024      # < v7x 64 MiB physical; fine on v5e/v6e


def _pick_tile(dim, preferred, align):
    """Largest tile <= preferred that divides dim and is align-sized (or dim).

    NOTE: falls back to tile == full dimension when no aligned divisor exists;
    for very large, oddly-sized dims pad the input instead.
    """
    if dim <= preferred:
        return dim
    t = (preferred // align) * align
    while t >= align:
        if dim % t == 0:
            return t
        t -= align
    return dim


# --------------------------- tiled linear (no bias) --------------------------

def _linear_kernel_f32(x_ref, w_ref, o_ref):
    """f32 output: accumulate directly into the resident output block."""
    @pl.when(pl.program_id(2) == 0)
    def _init():
        o_ref[...] = jnp.zeros_like(o_ref)

    o_ref[...] += jnp.dot(x_ref[...].astype(jnp.bfloat16),
                          w_ref[...].astype(jnp.bfloat16),
                          preferred_element_type=jnp.float32)


def _linear_kernel_acc(x_ref, w_ref, o_ref, acc_ref):
    """Narrow output dtype: keep an f32 VMEM accumulator, flush at last k."""
    @pl.when(pl.program_id(2) == 0)
    def _init():
        acc_ref[...] = jnp.zeros_like(acc_ref)

    acc_ref[...] += jnp.dot(x_ref[...].astype(jnp.bfloat16),
                            w_ref[...].astype(jnp.bfloat16),
                            preferred_element_type=jnp.float32)

    @pl.when(pl.program_id(2) == pl.num_programs(2) - 1)
    def _flush():
        o_ref[...] = acc_ref[...].astype(o_ref.dtype)


def linear_nobias(x2d, w, *, out_dtype=None, tm=512, tn=512, tk=256):
    """y = x2d @ w with w stored (in_features, out_features); bf16 MXU feed."""
    M, K = x2d.shape
    _, N = w.shape
    out_dtype = x2d.dtype if out_dtype is None else out_dtype
    tm = _pick_tile(M, tm, 8)
    tn = _pick_tile(N, tn, 128)
    tk = _pick_tile(K, tk, 128)
    grid = (M // tm, N // tn, K // tk)
    common = dict(
        grid=grid,
        out_shape=jax.ShapeDtypeStruct((M, N), out_dtype),
        in_specs=[pl.BlockSpec((tm, tk), lambda i, j, k: (i, k)),
                  pl.BlockSpec((tk, tn), lambda i, j, k: (k, j))],
        out_specs=pl.BlockSpec((tm, tn), lambda i, j, k: (i, j)),
        compiler_params=pltpu.CompilerParams(
            dimension_semantics=("parallel", "parallel", "arbitrary"),
            vmem_limit_bytes=_VMEM_LIMIT),
    )
    if np.dtype(out_dtype) == np.dtype(jnp.float32):
        return pl.pallas_call(_linear_kernel_f32, **common)(x2d, w)
    return pl.pallas_call(_linear_kernel_acc,
                          scratch_shapes=[pltpu.VMEM((tm, tn), jnp.float32)],
                          **common)(x2d, w)


# ------------------------- one-shot RoPE rotation pass -----------------------

def _rope_kernel(x_ref, cos_ref, sin_ref, o_ref, *, num_heads, head_dim, scale):
    """Rotate one (1, rows, H) slab.  Features are in per-head split-half
    order (done once on the projection weights), so the rotation is two
    contiguous half-slices per head; the output is built full-width and
    written with ONE lane-dense store (bf16)."""
    d2 = head_dim // 2
    cos = cos_ref[...]                     # (rows, d2) f32
    sin = sin_ref[...]
    cols = []
    for h in range(num_heads):
        b0 = h * head_dim
        e = x_ref[0, :, b0:b0 + d2]
        o = x_ref[0, :, b0 + d2:b0 + head_dim]
        cols.append((e * cos - o * sin) * scale)
        cols.append((o * cos + e * sin) * scale)
    o_ref[0] = jnp.concatenate(cols, axis=-1).astype(o_ref.dtype)


def rope_rotate(x, cos, sin, *, num_heads, head_dim, scale,
                out_dtype=jnp.bfloat16, row_tile=256):
    B, N, H = x.shape
    d2 = head_dim // 2
    tr = _pick_tile(N, row_tile, 8)
    kern = partial(_rope_kernel, num_heads=num_heads, head_dim=head_dim,
                   scale=float(scale))
    return pl.pallas_call(
        kern,
        grid=(B, N // tr),
        out_shape=jax.ShapeDtypeStruct((B, N, H), out_dtype),
        in_specs=[pl.BlockSpec((1, tr, H), lambda b, r: (b, r, 0)),
                  pl.BlockSpec((tr, d2), lambda b, r: (r, 0)),
                  pl.BlockSpec((tr, d2), lambda b, r: (r, 0))],
        out_specs=pl.BlockSpec((1, tr, H), lambda b, r: (b, r, 0)),
        compiler_params=pltpu.CompilerParams(
            dimension_semantics=("parallel", "parallel"),
            vmem_limit_bytes=_VMEM_LIMIT),
    )(x, cos, sin)


# ------------------------------ flash attention ------------------------------

def _flash_mha_kernel(sp_ref, pm_ref, q_ref, k_ref, v_ref, o_ref,
                      m_scr, l_scr, acc_scr, *, num_heads, head_dim, causal):
    """One (batch, q-tile, kv-tile) step of online-softmax attention.

    q/k arrive pre-rotated (RoPE) and q pre-scaled, both bf16; v is bf16.
    Heads are contiguous head_dim-wide column groups of the lane-dense
    (1, tile, H) slabs.  The kv grid axis is 'arbitrary'; m/l/acc live in
    VMEM scratch; the output is one full-width store at the last kv step.
    """
    qi = pl.program_id(1)
    ki = pl.program_id(2)
    tq = q_ref.shape[1]
    tkv = k_ref.shape[1]
    start_pos = sp_ref[0]                                  # SMEM scalar

    @pl.when(ki == 0)
    def _init():
        # -1e30 (not -inf): a fully padded row degenerates to mean(V) instead
        # of NaN, matching the finite-mask reference.
        m_scr[...] = jnp.full(m_scr.shape, _MASK_VALUE, m_scr.dtype)
        l_scr[...] = jnp.zeros_like(l_scr)
        acc_scr[...] = jnp.zeros_like(acc_scr)

    def _compute_tile():
        allowed = pm_ref[0] > 0                            # (1, tkv) key padding
        if causal:
            q_pos = qi * tq + jax.lax.broadcasted_iota(jnp.int32, (tq, tkv), 0)
            k_pos = ki * tkv + jax.lax.broadcasted_iota(jnp.int32, (tq, tkv), 1)
            allowed = jnp.logical_and(allowed,
                                      (k_pos < start_pos) | (k_pos <= q_pos))
        allowed = jnp.broadcast_to(allowed, (tq, tkv))

        dn = (((1,), (1,)), ((), ()))   # contract last axes: Q @ K^T, no k.T
        for h in range(num_heads):
            base = h * head_dim
            q_h = q_ref[0, :, base:base + head_dim]        # (tq, d)  bf16
            k_h = k_ref[0, :, base:base + head_dim]        # (tkv, d) bf16
            # Single full-depth contraction per head on the MXU, f32 accumulate.
            s = jax.lax.dot_general(q_h, k_h, dn,
                                    preferred_element_type=jnp.float32)
            s = jnp.where(allowed, s, _MASK_VALUE)

            # Online softmax (all elementwise math in f32 - v5e-safe).
            m_prev = m_scr[h]                              # (tq, 1)
            m_new = jnp.maximum(m_prev, jnp.max(s, axis=-1, keepdims=True))
            alpha = jnp.exp(m_prev - m_new)
            p = jnp.exp(s - m_new)
            l_scr[h] = alpha * l_scr[h] + jnp.sum(p, axis=-1, keepdims=True)

            v_h = v_ref[0, :, base:base + head_dim].astype(jnp.bfloat16)
            pv = jnp.dot(p.astype(jnp.bfloat16), v_h,
                         preferred_element_type=jnp.float32)
            acc_scr[:, base:base + head_dim] = (
                alpha * acc_scr[:, base:base + head_dim] + pv)
            m_scr[h] = m_new

    if causal:
        # Skip kv tiles that are entirely above the diagonal (and past
        # start_pos): they contribute nothing to m/l/acc.
        k_lo = ki * tkv
        q_hi = qi * tq + (tq - 1)
        pl.when((k_lo < start_pos) | (k_lo <= q_hi))(_compute_tile)
    else:
        _compute_tile()

    @pl.when(ki == pl.num_programs(2) - 1)
    def _finalize():
        inv_cols = []
        for h in range(num_heads):
            inv = pl.reciprocal(l_scr[h], approx=True)     # EUP slot, ~free
            inv_cols.append(jnp.broadcast_to(inv, (tq, head_dim)))
        inv_full = jnp.concatenate(inv_cols, axis=-1)      # (tq, H)
        # Single lane-dense full-width store of the normalized output.
        o_ref[0] = (acc_scr[...] * inv_full).astype(o_ref.dtype)


def mha_flash_attention(q, k, v, key_mask, *, num_heads, is_causal, start_pos,
                        q_tile=128, kv_tile=128):
    """Flash attention over lane-dense (B, N, H) activations (q/k/v bf16)."""
    B, N, H = q.shape
    head_dim = H // num_heads
    tq = _pick_tile(N, q_tile, 8)
    tkv = _pick_tile(N, kv_tile, 128)
    grid = (B, N // tq, N // tkv)

    kern = partial(_flash_mha_kernel, num_heads=num_heads, head_dim=head_dim,
                   causal=bool(is_causal))

    q_spec = pl.BlockSpec((1, tq, H), lambda b, qi, ki, sp: (b, qi, 0))
    kv_spec = pl.BlockSpec((1, tkv, H), lambda b, qi, ki, sp: (b, ki, 0))
    pm_spec = pl.BlockSpec((1, 1, tkv), lambda b, qi, ki, sp: (b, 0, ki))
    out_spec = pl.BlockSpec((1, tq, H), lambda b, qi, ki, sp: (b, qi, 0))

    start = jnp.asarray([start_pos], dtype=jnp.int32)      # SMEM scalar prefetch

    return pl.pallas_call(
        kern,
        grid_spec=pltpu.PrefetchScalarGridSpec(
            num_scalar_prefetch=1,
            grid=grid,
            in_specs=[pm_spec, q_spec, kv_spec, kv_spec],
            out_specs=out_spec,
            scratch_shapes=[
                pltpu.VMEM((num_heads, tq, 1), jnp.float32),   # running max
                pltpu.VMEM((num_heads, tq, 1), jnp.float32),   # running sum
                pltpu.VMEM((tq, H), jnp.float32),              # lane-dense PV acc
            ]),
        out_shape=jax.ShapeDtypeStruct((B, N, H), jnp.float32),
        compiler_params=pltpu.CompilerParams(
            dimension_semantics=("parallel", "parallel", "arbitrary"),
            vmem_limit_bytes=_VMEM_LIMIT),
    )(start, key_mask, q, k, v)


# ------------------------------ JAX glue --------------------------------------

def rope_tables(n, head_dim, theta=10000.0):
    """cos/sin tables for the split-half layout: shape (n, head_dim // 2)."""
    inv_freq = 1.0 / (theta ** (jnp.arange(0, head_dim, 2, dtype=jnp.float32)
                                / head_dim))
    ang = jnp.arange(n, dtype=jnp.float32)[:, None] * inv_freq[None, :]
    return jnp.cos(ang), jnp.sin(ang)


def _split_half_perm(num_heads, head_dim):
    """Per-head output-feature permutation: interleaved -> split-half rotary."""
    per_head = jnp.concatenate([jnp.arange(0, head_dim, 2),
                                jnp.arange(1, head_dim, 2)])
    return jnp.concatenate([h * head_dim + per_head for h in range(num_heads)])


class MultiHeadAttentionPallas:
    """Pallas-TPU port of phonira MultiHeadAttention (eval mode)."""

    def __init__(self, hidden_size, num_heads, key, dropout_p=0.1):
        assert hidden_size % num_heads == 0
        head_dim = hidden_size // num_heads
        assert head_dim % 2 == 0
        self.hidden_size = hidden_size
        self.num_heads = num_heads
        self.head_dim = head_dim
        # TODO(synk): dropout not applied (module is run in eval mode -> dropout_p = 0)
        self.dropout_p = dropout_p

        k1, k2, k3, k4 = jax.random.split(key, 4)
        bound = 1.0 / math.sqrt(hidden_size)     # nn.Linear default init range
        init = lambda k: jax.random.uniform(
            k, (hidden_size, hidden_size), jnp.float32, -bound, bound)
        # torch-layout (out_features, in_features) f32 weights, kept for reference
        self.w_q = init(k1)
        self.w_k = init(k2)
        self.w_v = init(k3)
        self.w_out = init(k4)

        # Kernel-side weights, prepared once:
        #  * (in, out) layout, stored bf16 (halves weight DMA, feeds MXU bf16)
        #  * q/k output features permuted per head into split-half rotary order
        #    (identical permutation of Q and K within a head leaves Q@K^T
        #    unchanged; V / output projection untouched).
        perm = _split_half_perm(num_heads, head_dim)
        self.wt_q = self.w_q[perm, :].T.astype(jnp.bfloat16)
        self.wt_k = self.w_k[perm, :].T.astype(jnp.bfloat16)
        self.wt_v = self.w_v.T.astype(jnp.bfloat16)
        self.wt_out = self.w_out.T.astype(jnp.bfloat16)
        # Fused QKV weight for self-attention (read the activation once).
        self.wt_qkv = jnp.concatenate([self.wt_q, self.wt_k, self.wt_v], axis=1)

    def __call__(self, x_q, x_k, x_v, padding_mask=None, is_causal=False,
                 start_pos=0):
        B, N, H = x_q.shape

        if (x_k is x_q) and (x_v is x_q):
            # Self-attention: one fused (H, 3H) projection.
            qkv = linear_nobias(x_q.reshape(B * N, H), self.wt_qkv)
            q = qkv[:, :H].reshape(B, N, H)
            k = qkv[:, H:2 * H].reshape(B, N, H)
            v = qkv[:, 2 * H:].reshape(B, N, H).astype(jnp.bfloat16)
        else:
            q = linear_nobias(x_q.reshape(B * N, H), self.wt_q).reshape(B, N, H)
            k = linear_nobias(x_k.reshape(B * N, H), self.wt_k).reshape(B, N, H)
            v = linear_nobias(x_v.reshape(B * N, H), self.wt_v,
                              out_dtype=jnp.bfloat16).reshape(B, N, H)

        # RoPE applied ONCE per tensor (no per-q-tile K re-rotation);
        # 1/sqrt(head_dim) folded into Q; outputs bf16 for the MXU.
        # NOTE: positions start at 0 regardless of start_pos (matches the
        # reference rotary_emb.rotate_queries_or_keys semantics).
        cos, sin = rope_tables(N, self.head_dim)
        q = rope_rotate(q, cos, sin, num_heads=self.num_heads,
                        head_dim=self.head_dim,
                        scale=1.0 / math.sqrt(self.head_dim))
        k = rope_rotate(k, cos, sin, num_heads=self.num_heads,
                        head_dim=self.head_dim, scale=1.0)

        if padding_mask is None:
            key_mask = jnp.ones((B, 1, N), jnp.int32)
        else:
            key_mask = padding_mask.reshape(B, 1, N).astype(jnp.int32)

        attn = mha_flash_attention(
            q, k, v, key_mask, num_heads=self.num_heads,
            is_causal=is_causal, start_pos=start_pos)

        out = linear_nobias(attn.reshape(B * N, H), self.wt_out)
        return out.reshape(B, N, H)


# --------------------------- pure-JAX reference --------------------------------

def reference_mha(m, x_q, x_k, x_v, padding_mask=None, is_causal=False,
                  start_pos=0):
    B, N, H = x_q.shape
    nh, d = m.num_heads, m.head_dim
    q, k, v = x_q @ m.w_q.T, x_k @ m.w_k.T, x_v @ m.w_v.T
    heads = lambda t: t.reshape(B, N, nh, d).transpose(0, 2, 1, 3)
    qh, kh, vh = heads(q), heads(k), heads(v)
    inv_freq = 1.0 / (10000.0 ** (jnp.arange(0, d, 2, dtype=jnp.float32) / d))
    ang = jnp.arange(N, dtype=jnp.float32)[:, None] * inv_freq[None, :]
    ang = jnp.repeat(ang, 2, axis=-1)          # interleaved [a0,a0,a1,a1,...]
    cos, sin = jnp.cos(ang), jnp.sin(ang)

    def rot_half(t):
        t2 = t.reshape(t.shape[:-1] + (d // 2, 2))
        return jnp.stack((-t2[..., 1], t2[..., 0]), axis=-1).reshape(t.shape)

    qh = qh * cos + rot_half(qh) * sin
    kh = kh * cos + rot_half(kh) * sin
    s = jnp.einsum('bhqd,bhkd->bhqk', qh, kh) / math.sqrt(d)
    allowed = jnp.ones((B, 1, N, N), bool)
    if is_causal:
        qpos = jnp.arange(N)[:, None]
        kpos = jnp.arange(N)[None, :]
        allowed = allowed & ((kpos < start_pos) | (kpos <= qpos))
    if padding_mask is not None:
        allowed = allowed & padding_mask[:, None, None, :]
    s = jnp.where(allowed, s, _MASK_VALUE)
    p = jax.nn.softmax(s, axis=-1)
    o = jnp.einsum('bhqk,bhkd->bhqd', p, vh)
    return o.transpose(0, 2, 1, 3).reshape(B, N, H) @ m.w_out.T


# --------------------------------- main ----------------------------------------

if __name__ == "__main__":
    B, N, H, NH = 2, 8, 32, 4

    key = jax.random.PRNGKey(0)
    k_params, k_q, k_k, k_v = jax.random.split(key, 4)

    mha = MultiHeadAttentionPallas(hidden_size=H, num_heads=NH, key=k_params)

    x_q = jax.random.normal(k_q, (B, N, H), dtype=jnp.float32)
    x_k = jax.random.normal(k_k, (B, N, H), dtype=jnp.float32)
    x_v = jax.random.normal(k_v, (B, N, H), dtype=jnp.float32)

    # 1) cross-attention, no mask (separate Q/K/V projections)
    out = jax.block_until_ready(mha(x_q, x_k, x_v))
    assert out.shape == (B, N, H) and out.dtype == jnp.float32
    assert bool(jnp.all(jnp.isfinite(out)))
    ref = reference_mha(mha, x_q, x_k, x_v)
    assert bool(jnp.allclose(out, ref, rtol=3e-2, atol=3e-2)), \
        float(jnp.max(jnp.abs(out - ref)))

    # 2) causal self-attention (fused QKV path) with key padding and start_pos
    pad = jnp.ones((B, N), dtype=bool).at[1, -2:].set(False)
    out2 = jax.block_until_ready(
        mha(x_q, x_q, x_q, padding_mask=pad, is_causal=True, start_pos=2))
    assert bool(jnp.all(jnp.isfinite(out2)))
    ref2 = reference_mha(mha, x_q, x_q, x_q, padding_mask=pad,
                         is_causal=True, start_pos=2)
    assert bool(jnp.allclose(out2, ref2, rtol=3e-2, atol=3e-2)), \
        float(jnp.max(jnp.abs(out2 - ref2)))

    print("KERNEL_OK")
</pallas_src>

<mosaic_0001>
module attributes {stable_mosaic.version = 11 : i64} {
  func.func @_linear_kernel_f32(%arg0: i32, %arg1: i32, %arg2: i32, %arg3: memref<16x32xf32, #tpu.memory_space<vmem>>, %arg4: memref<32x32xbf16, #tpu.memory_space<vmem>>, %arg5: memref<16x32xf32, #tpu.memory_space<vmem>>) attributes {dimension_semantics = [#tpu.dimension_semantics<parallel>, #tpu.dimension_semantics<parallel>, #tpu.dimension_semantics<arbitrary>], iteration_bounds = array<i64: 1, 1, 1>, scalar_prefetch = 0 : i64, scratch_operands = 0 : i64, tpu.core_type = #tpu.core_type<tc>, window_params = [{transform_indices = @transform_0, window_bounds = array<i64: 16, 32>}, {transform_indices = @transform_1, window_bounds = array<i64: 32, 32>}, {transform_indices = @transform_2, window_bounds = array<i64: 16, 32>}]} {
    %c0_i32 = arith.constant 0 : i32
    %0 = arith.cmpi eq, %arg2, %c0_i32 : i32
    %1 = arith.extui %0 : i1 to i32
    %c0_i32_0 = arith.constant 0 : i32
    %2 = arith.cmpi ne, %1, %c0_i32_0 : i32
    scf.if %2 {
      %cst_8 = arith.constant 0.000000e+00 : f32
      %10 = vector.broadcast %cst_8 : f32 to vector<16x32xf32>
      %c0_9 = arith.constant 0 : index
      %c0_10 = arith.constant 0 : index
      %11 = vector.load %arg5[%c0_9, %c0_10] : memref<16x32xf32, #tpu.memory_space<vmem>>, vector<16x32xf32>
      tpu.vector_store %arg5[%c0_9, %c0_10], %10 {strides = array<i32>} : memref<16x32xf32, #tpu.memory_space<vmem>>, vector<16x32xf32>,
    } else {
    }
    %c0 = arith.constant 0 : index
    %c0_1 = arith.constant 0 : index
    %3 = vector.load %arg5[%c0, %c0_1] : memref<16x32xf32, #tpu.memory_space<vmem>>, vector<16x32xf32>
    %c0_2 = arith.constant 0 : index
    %c0_3 = arith.constant 0 : index
    %4 = vector.load %arg3[%c0_2, %c0_3] : memref<16x32xf32, #tpu.memory_space<vmem>>, vector<16x32xf32>
    %5 = arith.truncf %4 : vector<16x32xf32> to vector<16x32xbf16>
    %c0_4 = arith.constant 0 : index
    %c0_5 = arith.constant 0 : index
    %6 = vector.load %arg4[%c0_4, %c0_5] : memref<32x32xbf16, #tpu.memory_space<vmem>>, vector<32x32xbf16>
    %cst = arith.constant dense<0.000000e+00> : vector<16x32xf32>
    %7 = tpu.matmul %5, %6, %cst {dimension_numbers = #tpu.dot_dimension_numbers<[1], [0], [0], [1], [0, 0, 1, 1], [], []>} : vector<16x32xbf16>, vector<32x32xbf16>, vector<16x32xf32> -> vector<16x32xf32>
    %8 = arith.addf %3, %7 : vector<16x32xf32>
    %c0_6 = arith.constant 0 : index
    %c0_7 = arith.constant 0 : index
    %9 = vector.load %arg5[%c0_6, %c0_7] : memref<16x32xf32, #tpu.memory_space<vmem>>, vector<16x32xf32>
    tpu.vector_store %arg5[%c0_6, %c0_7], %8 {strides = array<i32>} : memref<16x32xf32, #tpu.memory_space<vmem>>, vector<16x32xf32>,
    return
  }
  func.func @transform_0(%arg0: i32, %arg1: i32, %arg2: i32) -> (i32, i32) {
    %c0_i32 = arith.constant 0 : i32
    return %arg0, %arg2 : i32, i32
  }
  func.func @transform_1(%arg0: i32, %arg1: i32, %arg2: i32) -> (i32, i32) {
    %c0_i32 = arith.constant 0 : i32
    return %arg2, %arg1 : i32, i32
  }
  func.func @transform_2(%arg0: i32, %arg1: i32, %arg2: i32) -> (i32, i32) {
    %c0_i32 = arith.constant 0 : i32
    return %arg0, %arg1 : i32, i32
  }
}

</mosaic_0001>

<llo_original>
// kernel: tpu_custom_call.1
$region0: #{tpu_custom_call.1}
  #allocation0 [shape = 'u32[]', space=smem, size = 0x4, offset = 0x4, fixed_abs, tag = 'smem constant byte address 0x4 - core index']
  #allocation1 [shape = 'u32[144,128]{1,0:T(1,128)}', space=vmem, size = 0x12000, scoped, tag = 'internal scratch']
  %s0 = inlined_call_operand.hbm [shape: f32[16,32], index: 0, kind: input, shape index: {}]
  %s1 = inlined_call_operand.hbm [shape: bf16[32,32], index: 1, kind: input, shape index: {}]
  %s2 = inlined_call_operand.hbm [shape: f32[16,32], index: 2, kind: output, shape index: {}]
  %s3 = sld [smem:[#allocation0]]
  $region30: #{tpu_custom_call.1} parent=0
    _
  %s5 = ssub.s32 1, %s3
  %s6 = scalar_select 0, %s5, %s3
  $region1: #{tpu_custom_call.1} parent=0
    #allocation2 [shape = 'u8[8192]{0}', space=vmem, size = 0x2000, scoped, tag = 'input window, operand 0, single buffered']
    #allocation3 [shape = 's32[1]{0}', space=sflag, size = 0x4, scoped, tag = 'scoped memory for tpu_custom_call.1']
    #allocation4 [shape = 's32[1]{0}', space=sflag, size = 0x4, scoped, tag = 'scoped memory for tpu_custom_call.1']
    #allocation5 [shape = 'u8[8192]{0}', space=vmem, size = 0x2000, scoped, tag = 'input window, operand 1, single buffered']
    #allocation6 [shape = 's32[1]{0}', space=sflag, size = 0x4, scoped, tag = 'scoped memory for tpu_custom_call.1']
    #allocation7 [shape = 'u8[8192]{0}', space=vmem, size = 0x2000, scoped, tag = 'output window, operand 0, single buffered']
    %7 = vsyncpa [#allocation3], 0
    %8 = vsyncpa [#allocation6], 0
    %9 = vsyncpa [#allocation4], 0
    // Predicated region
    $region2: #{tpu_custom_call.1} parent=1 // pred_check
      _
    $region3: #{tpu_custom_call.1} parent=1 // pred_check_branch
      %11 = sbr.rel (0) target = $region5
    $region4: #{tpu_custom_call.1} parent=1 // pred_region
      %s13 = ssub.s32 256, 256
      %14 = vsyncadd [#allocation3], %s13
      %s15 = sshll.u32 [#allocation2], 4
      %s16 = int_to_ptr.vmem [resolvable:$true] %s15
      %21 = dma.hbm_to_vmem [thread:$0]  %s0, 256, %s16, [#allocation3], 128, 128, 8
    $region5: #{tpu_custom_call.1} parent=1 // pred_fallthru
      _
    // Predicated region
    $region6: #{tpu_custom_call.1} parent=1 // pred_check
      _
    $region7: #{tpu_custom_call.1} parent=1 // pred_check_branch
      %23 = sbr.rel (0) target = $region9
    $region8: #{tpu_custom_call.1} parent=1 // pred_region
      %s25 = ssub.s32 256, 256
      %26 = vsyncadd [#allocation6], %s25
      %s27 = sshll.u32 [#allocation5], 4
      %s28 = int_to_ptr.vmem [resolvable:$true] %s27
      %33 = dma.hbm_to_vmem [thread:$0]  %s1, 256, %s28, [#allocation6], 64, 64, 4
    $region9: #{tpu_custom_call.1} parent=1 // pred_fallthru
      _
    // Predicated region
    $region10: #{tpu_custom_call.1} parent=1 // pred_check
      _
    $region11: #{tpu_custom_call.1} parent=1 // pred_check_branch
      %35 = sbr.rel (0) target = $region13
    $region12: #{tpu_custom_call.1} parent=1 // pred_region
      %36 = dma.done [#allocation3], 256
    $region13: #{tpu_custom_call.1} parent=1 // pred_fallthru
      _
    // Predicated region
    $region14: #{tpu_custom_call.1} parent=1 // pred_check
      _
    $region15: #{tpu_custom_call.1} parent=1 // pred_check_branch
      %38 = sbr.rel (0) target = $region17
    $region16: #{tpu_custom_call.1} parent=1 // pred_region
      %39 = dma.done [#allocation6], 256
    $region17: #{tpu_custom_call.1} parent=1 // pred_fallthru
      _
    %p41 = scmp.eq.s32.totalorder 0, 0
    // Predicated region
    $region18: #{tpu_custom_call.1} parent=1 // pred_check
      %p42 = pneg %p41
    $region19: #{tpu_custom_call.1} parent=1 // pred_check_branch
      %44 = sbr.rel (%p42) target = $region21
    $region20: #{tpu_custom_call.1} parent=1 // pred_region
      %vm45 = vcmask 261120
      %46 = vst.msk [vmem:[#allocation7] sm:$0xff] %vm45, 0.0
      %47 = vst.msk [vmem:[#allocation7 + $0x8] sm:$0xff] %vm45, 0.0
    $region21: #{tpu_custom_call.1} parent=1 // pred_fallthru
      _
    %v48 = vld [vmem:[#allocation7] sm:$0xff]
    %v49 = vld [vmem:[#allocation7 + $0x8] sm:$0xff]
    %v50 = vld [vmem:[#allocation2] sm:$0xff]
    %v51 = vld [vmem:[#allocation2 + $0x8] sm:$0xff]
    %v52 = vpack.c.bf16 %v51, %v50
    %v53 = vld [vmem:[#allocation5] sm:$0xf]
    %v54 = vld [vmem:[#allocation5 + $0x4] sm:$0xf]
    %v55 = vld [vmem:[#allocation5 + $0x8] sm:$0xf]
    %v56 = vld [vmem:[#allocation5 + $0xc] sm:$0xf]
    %v61 = vunpack.c.l.b16 %v53
    %v62 = vunpack.c.l.b16 %v54
    %v63 = vunpack.c.l.b16 %v55
    %v64 = vunpack.c.l.b16 %v56
    %v65 = vpack.c.b16 %v62, %v61
    %v66 = vpack.c.b16 %v64, %v63
    %vm69 = vcmask 261120
    %v71 = vsel %vm69, %v52, 0
    %73 = vmatprep.subr.bf16.mxu0 0
    %74 = vmatpush1.bf16.msra.mxu0 0
    %75 = vmatprep.subr.bf16.mxu0 0
    %76 = vmatpush1.bf16.msra.mxu0 0
    %77 = vmatprep.subr.bf16.mxu0 0
    %78 = vmatpush1.bf16.msra.mxu0 0
    %79 = vmatprep.subr.bf16.mxu0 0
    %80 = vmatpush1.bf16.msra.mxu0 0
    %81 = vmatprep.subr.bf16.mxu0 0
    %82 = vmatpush1.bf16.msra.mxu0 0
    %83 = vmatprep.subr.bf16.mxu0 0
    %84 = vmatpush1.bf16.msra.mxu0 0
    %85 = vmatprep.subr.bf16.mxu0 0
    %86 = vmatpush1.bf16.msra.mxu0 %v66
    %87 = vmatprep.subr.bf16.mxu0 0
    %88 = vmatpush1.bf16.msra.mxu0 %v65
    %89 = vmatprep.subr.bf16.mxu0 0
    %90 = vmatpush2.bf16.msra.mxu0 0
    %91 = vmatprep.subr.bf16.mxu0 0
    %92 = vmatpush2.bf16.msra.mxu0 0
    %93 = vmatprep.subr.bf16.mxu0 0
    %94 = vmatpush2.bf16.msra.mxu0 0
    %95 = vmatprep.subr.bf16.mxu0 0
    %96 = vmatpush2.bf16.msra.mxu0 0
    %97 = vmatprep.subr.bf16.mxu0 0
    %98 = vmatpush2.bf16.msra.mxu0 0
    %99 = vmatprep.subr.bf16.mxu0 0
    %100 = vmatpush2.bf16.msra.mxu0 0
    %101 = vmatprep.subr.bf16.mxu0 0
    %102 = vmatpush2.bf16.msra.mxu0 0
    %103 = vmatprep.subr.bf16.mxu0 0
    %104 = vmatpush2.bf16.msra.mxu0 0
    %105 = vmatprep.mubr.bf16.mxu0 0
    %106 = vmatmul.mubr.bf16.gmra.mxu0 %v71
    %v107 = vpop.f32.mrf.mxu0
    %v108 = vadd.f32 0.0, %v107
    %v109 = vpop.f32.mrf.mxu0
    %v110 = vpop.f32.mrf.mxu0
    %v111 = vadd.f32 0.0, %v110
    %v112 = vpop.f32.mrf.mxu0
    %113 = vdwg.mxu0
    %v114 = vadd.f32 %v48, %v108
    %v115 = vadd.f32 %v49, %v111
    %116 = vst.msk [vmem:[#allocation7] sm:$0xff] %vm69, %v114
    %117 = vst.msk [vmem:[#allocation7 + $0x8] sm:$0xff] %vm69, %v115
    // Predicated region
    $region22: #{tpu_custom_call.1} parent=1 // pred_check
      _
    $region23: #{tpu_custom_call.1} parent=1 // pred_check_branch
      %119 = sbr.rel (0) target = $region25
    $region24: #{tpu_custom_call.1} parent=1 // pred_region
      %s121 = ssub.s32 256, 256
      %122 = vsyncadd [#allocation4], %s121
      %s123 = sshll.u32 [#allocation7], 4
      %s124 = int_to_ptr.vmem [resolvable:$true] %s123
      %129 = dma.vmem_to_hbm [thread:$0]  %s124, 256, %s2, [#allocation4], 128, 128, 8
    $region25: #{tpu_custom_call.1} parent=1 // pred_fallthru
      _
    // Predicated region
    $region26: #{tpu_custom_call.1} parent=1 // pred_check
      _
    $region27: #{tpu_custom_call.1} parent=1 // pred_check_branch
      %131 = sbr.rel (0) target = $region29
    $region28: #{tpu_custom_call.1} parent=1 // pred_region
      %132 = dma.done [#allocation4], 256
    $region29: #{tpu_custom_call.1} parent=1 // pred_fallthru
      _
    %133 = vsyncpa [#allocation3], 1
    %134 = vsyncpa [#allocation6], 1
    %135 = vsyncpa [#allocation4], 1

</llo_original>
